<compile_context>
chip_gen: v7x
topology: tpu7x:2x2x1
jax: 0.10.0
libtpu: 0.0.40
codegen_flags: <defaults>
</compile_context>

<pallas_src>
import numpy as np
import jax
import jax.numpy as jnp
from jax.experimental import pallas as pl
from jax.experimental.pallas import tpu as pltpu

MARGIN_P = 0.5
MARGIN_N = 1.5
EPS = 1e-9


def _rowdist_kernel(o1_ref, o2_ref, d2_ref):
    """Per-row squared L2 distance for one (TILE_N, D) row tile.

    Output block is a lane-dense (1, TILE_N) row: the column->row relayout
    happens once per tile (XLU), and the stores are lane-dense.
    """
    o1 = o1_ref[...].astype(jnp.float32)   # no-op when the input is already f32
    o2 = o2_ref[...].astype(jnp.float32)
    diff = o2 - o1                                          # VPU
    dist = jnp.sum(diff * diff, axis=1, keepdims=True)      # (TILE_N, 1) lane reduce
    d2_ref[0, :] = dist[:, 0]                               # lane-dense row store


def _round_up(x, m):
    return ((x + m - 1) // m) * m


def _vmem_capacity_bytes():
    try:
        cap = getattr(pltpu.get_tpu_info(), "vmem_capacity_bytes", None)
        if cap:
            return int(cap)
    except Exception:
        pass
    return 64 * 1024 * 1024  # conservative default (v7x per-TensorCore)


def _pairwise_sq_dist(output1, output2, *, max_tile_rows=4096):
    """||output2 - output1||^2 per row, streamed through VMEM row tiles."""
    n, d = output1.shape
    i1 = output1.dtype.itemsize
    i2 = output2.dtype.itemsize
    # Sublane granule for the narrower input dtype: 8 rows @ 4B, 16 @ 2B, 32 @ 1B.
    granule = 8 * max(1, 4 // min(i1, i2))

    # Per-generation VMEM budget: half the physical capacity, capped at 64 MiB
    # (-> 64 MiB scoped limit on v5e/v6e, 32 MiB on v7x's 64 MiB VMEM), with
    # headroom left for outputs / compiler scratch.
    vmem_cap = _vmem_capacity_bytes()
    vmem_limit = min(vmem_cap // 2, 64 * 1024 * 1024)
    input_budget = max(4 * 1024 * 1024, vmem_limit - 8 * 1024 * 1024)

    # Row tile: 2 inputs x 2 pipeline buffers must fit the input budget.
    tile_n = input_budget // (2 * d * (i1 + i2))
    tile_n = int(max(granule, min(max_tile_rows, tile_n)))
    tile_n = (tile_n // granule) * granule
    tile_n = min(tile_n, _round_up(n, granule))   # never bigger than the batch
    if tile_n >= 128:                             # lane-align the output rows
        tile_n = _round_up(tile_n, 128)
    # TODO(synk): for very large D (tile_n pinned at `granule`) a second
    # "arbitrary" grid axis over D chunks with a small VMEM accumulator would
    # keep per-step DMA large; not needed for these shapes.

    num_tiles = pl.cdiv(n, tile_n)  # ragged last block; garbage rows sliced off below

    d2 = pl.pallas_call(
        _rowdist_kernel,
        grid=(num_tiles,),
        in_specs=[
            pl.BlockSpec((tile_n, d), lambda i: (i, 0)),
            pl.BlockSpec((tile_n, d), lambda i: (i, 0)),
        ],
        out_specs=pl.BlockSpec((1, tile_n), lambda i: (i, 0)),
        out_shape=jax.ShapeDtypeStruct((num_tiles, tile_n), jnp.float32),
        compiler_params=pltpu.CompilerParams(
            dimension_semantics=("parallel",),   # independent row tiles (megacore/v7x)
            vmem_limit_bytes=int(vmem_limit),
        ),
    )(output1, output2)

    # Drop the ragged-tail rows (their inputs were garbage) before any reduction.
    return d2.reshape(num_tiles * tile_n)[:n]


def double_margin_contrastive_loss_ohem(output1, output2, target, *,
                                        margin_p=MARGIN_P, margin_n=MARGIN_N,
                                        eps=EPS, size_average=True,
                                        max_tile_rows=4096):
    """output1, output2: (N, D) float; target: (N,) 0/1 (1 = same class)."""
    n = output1.shape[0]
    d2 = _pairwise_sq_dist(output1, output2, max_tile_rows=max_tile_rows)

    # --- hinge losses + OHEM on N scalars in plain JAX (negligible next to the
    # N*D HBM traffic the kernel handles).
    # TODO(synk): data-dependent top-k has no Pallas TPU lowering (no sort
    # primitive), so hardest-negative selection stays in JAX.
    dist = jnp.sqrt(d2 + eps)
    is_pos = target.astype(jnp.float32) > 0.0

    lp = jnp.where(is_pos, 0.5 * jnp.square(jnp.maximum(dist - margin_p, 0.0)), 0.0)
    # Negative losses: sentinel -1 for positive pairs.  Real losses are >= 0 and
    # num_topk <= num_neg, so sentinels never survive the top-k selection.
    ln = jnp.where(is_pos, -1.0, 0.5 * jnp.square(jnp.maximum(margin_n - dist, 0.0)))

    num_pos = jnp.sum(target.astype(jnp.int32))
    num_neg = jnp.int32(n) - num_pos
    num_topk = jnp.minimum(jnp.maximum(jnp.int32(1), num_pos), num_neg)

    sum_p = jnp.sum(lp)
    ln_desc = jax.lax.top_k(ln, n)[0]                  # descending; sentinels sink
    take = jnp.arange(n, dtype=jnp.int32) < num_topk
    sum_n = jnp.sum(jnp.where(take, ln_desc, 0.0))

    total = sum_p + sum_n
    if size_average:
        count = (num_pos + num_topk).astype(jnp.float32)
        return total / count
    return total


def _reference(output1, output2, target, *, margin_p=MARGIN_P, margin_n=MARGIN_N,
               eps=EPS, size_average=True):
    """Numpy port of the PyTorch forward (prints removed)."""
    o1 = np.asarray(output1, dtype=np.float32)
    o2 = np.asarray(output2, dtype=np.float32)
    t = np.asarray(target)
    distances = ((o2 - o1) ** 2).sum(1)
    d = np.sqrt(distances + eps)
    losses_p = 0.5 * np.maximum(d[t.astype(bool)] - margin_p, 0.0) ** 2
    losses_n = 0.5 * np.maximum(margin_n - d[~t.astype(bool)], 0.0) ** 2
    num_pos = int(t.sum())
    num_topk = int(min(max(1, num_pos), losses_n.shape[0]))
    if losses_n.shape[0] > 0:
        losses_n = np.sort(losses_n)[::-1][:num_topk]
    losses = np.concatenate([losses_p, losses_n])
    return float(losses.mean()) if size_average else float(losses.sum())


if __name__ == "__main__":
    key = jax.random.PRNGKey(0)
    k1, k2, k3, k4, k5, k6 = jax.random.split(key, 6)

    # --- small embedding batch (N pairs of D-dim embeddings) -----------------
    N, D = 8, 32
    o1 = 0.2 * jax.random.normal(k1, (N, D), dtype=jnp.float32)
    o2 = 0.2 * jax.random.normal(k2, (N, D), dtype=jnp.float32)
    tgt = jax.random.bernoulli(k3, 0.5, (N,)).astype(jnp.int32)

    loss = double_margin_contrastive_loss_ohem(o1, o2, tgt)
    jax.block_until_ready(loss)
    ref = _reference(o1, o2, tgt)
    assert np.allclose(float(loss), ref, rtol=1e-4, atol=1e-5), (float(loss), ref)

    loss_sum = double_margin_contrastive_loss_ohem(o1, o2, tgt, size_average=False)
    jax.block_until_ready(loss_sum)
    ref_sum = _reference(o1, o2, tgt, size_average=False)
    assert np.allclose(float(loss_sum), ref_sum, rtol=1e-4, atol=1e-5), (float(loss_sum), ref_sum)

    # --- ragged batch, single big tile (N=1200 -> 1280-row tile, no pad copy) -
    N2, D2 = 1200, 128
    o1b = 0.1 * jax.random.normal(k4, (N2, D2), dtype=jnp.float32)
    o2b = 0.1 * jax.random.normal(k5, (N2, D2), dtype=jnp.float32)
    tgtb = jax.random.bernoulli(k6, 0.3, (N2,)).astype(jnp.int32)

    loss_b = double_margin_contrastive_loss_ohem(o1b, o2b, tgtb)
    jax.block_until_ready(loss_b)
    ref_b = _reference(o1b, o2b, tgtb)
    assert np.allclose(float(loss_b), ref_b, rtol=1e-4, atol=1e-5), (float(loss_b), ref_b)

    # --- multi-tile grid with a ragged last block (forced small tile) --------
    loss_mt = double_margin_contrastive_loss_ohem(o1b, o2b, tgtb, max_tile_rows=256)
    jax.block_until_ready(loss_mt)
    assert np.allclose(float(loss_mt), ref_b, rtol=1e-4, atol=1e-5), (float(loss_mt), ref_b)

    # --- native bf16 inputs stream through at half the HBM bytes -------------
    o1h = o1b.astype(jnp.bfloat16)
    o2h = o2b.astype(jnp.bfloat16)
    loss_h = double_margin_contrastive_loss_ohem(o1h, o2h, tgtb)
    jax.block_until_ready(loss_h)
    ref_h = _reference(o1h.astype(jnp.float32), o2h.astype(jnp.float32), tgtb)
    assert np.allclose(float(loss_h), ref_h, rtol=1e-4, atol=1e-4), (float(loss_h), ref_h)

    print("KERNEL_OK")
</pallas_src>

<mosaic_0001>
module attributes {stable_mosaic.version = 11 : i64} {
  func.func @_rowdist_kernel(%arg0: i32, %arg1: memref<8x32xf32, #tpu.memory_space<vmem>>, %arg2: memref<8x32xf32, #tpu.memory_space<vmem>>, %arg3: memref<1x8xf32, #tpu.memory_space<vmem>>) attributes {dimension_semantics = [#tpu.dimension_semantics<parallel>], iteration_bounds = array<i64: 1>, scalar_prefetch = 0 : i64, scratch_operands = 0 : i64, tpu.core_type = #tpu.core_type<tc>, window_params = [{transform_indices = @transform_0, window_bounds = array<i64: 8, 32>}, {transform_indices = @transform_1, window_bounds = array<i64: 8, 32>}, {transform_indices = @transform_2, window_bounds = array<i64: 1, 8>}]} {
    %c0 = arith.constant 0 : index
    %c0_0 = arith.constant 0 : index
    %0 = vector.load %arg1[%c0, %c0_0] : memref<8x32xf32, #tpu.memory_space<vmem>>, vector<8x32xf32>
    %c0_1 = arith.constant 0 : index
    %c0_2 = arith.constant 0 : index
    %1 = vector.load %arg2[%c0_1, %c0_2] : memref<8x32xf32, #tpu.memory_space<vmem>>, vector<8x32xf32>
    %2 = arith.subf %1, %0 : vector<8x32xf32>
    %3 = arith.mulf %2, %2 : vector<8x32xf32>
    %cst = arith.constant dense<0.000000e+00> : vector<8xf32>
    %4 = vector.multi_reduction <add>, %3, %cst [1] : vector<8x32xf32> to vector<8xf32>
    %5 = vector.shape_cast %4 : vector<8xf32> to vector<8x1xf32>
    %6 = vector.shape_cast %5 : vector<8x1xf32> to vector<8xf32>
    %c0_3 = arith.constant 0 : index
    %c0_4 = arith.constant 0 : index
    %7 = vector.load %arg3[%c0_3, %c0_4] : memref<1x8xf32, #tpu.memory_space<vmem>>, vector<1x8xf32>
    %8 = vector.shape_cast %7 : vector<1x8xf32> to vector<8xf32>
    %9 = vector.shape_cast %6 : vector<8xf32> to vector<1x8xf32>
    tpu.vector_store %arg3[%c0_3, %c0_4], %9 {strides = array<i32>} : memref<1x8xf32, #tpu.memory_space<vmem>>, vector<1x8xf32>,
    return
  }
  func.func @transform_0(%arg0: i32) -> (i32, i32) {
    %c0_i32 = arith.constant 0 : i32
    %c0_i32_0 = arith.constant 0 : i32
    return %arg0, %c0_i32 : i32, i32
  }
  func.func @transform_1(%arg0: i32) -> (i32, i32) {
    %c0_i32 = arith.constant 0 : i32
    %c0_i32_0 = arith.constant 0 : i32
    return %arg0, %c0_i32 : i32, i32
  }
  func.func @transform_2(%arg0: i32) -> (i32, i32) {
    %c0_i32 = arith.constant 0 : i32
    %c0_i32_0 = arith.constant 0 : i32
    return %arg0, %c0_i32 : i32, i32
  }
}

</mosaic_0001>

<llo_original>
// kernel: tpu_custom_call.1
$region0: #{tpu_custom_call.1}
  #allocation0 [shape = 'u32[]', space=smem, size = 0x4, offset = 0x4, fixed_abs, tag = 'smem constant byte address 0x4 - core index']
  #allocation1 [shape = 'u32[144,128]{1,0:T(1,128)}', space=vmem, size = 0x12000, scoped, tag = 'internal scratch']
  %s0 = inlined_call_operand.hbm [shape: f32[8,32], index: 0, kind: input, shape index: {}]
  %s1 = inlined_call_operand.hbm [shape: f32[8,32], index: 1, kind: input, shape index: {}]
  %s2 = inlined_call_operand.hbm [shape: f32[1,8], index: 2, kind: output, shape index: {}]
  %s3 = sld [smem:[#allocation0]]
  $region26: #{tpu_custom_call.1} parent=0
    _
  %s5 = ssub.s32 1, %s3
  %s6 = scalar_select 0, %s5, %s3
  $region1: #{tpu_custom_call.1} parent=0
    #allocation2 [shape = 'u8[4096]{0}', space=vmem, size = 0x1000, scoped, tag = 'input window, operand 0, single buffered']
    #allocation3 [shape = 's32[1]{0}', space=sflag, size = 0x4, scoped, tag = 'scoped memory for tpu_custom_call.1']
    #allocation4 [shape = 's32[1]{0}', space=sflag, size = 0x4, scoped, tag = 'scoped memory for tpu_custom_call.1']
    #allocation5 [shape = 'u8[4096]{0}', space=vmem, size = 0x1000, scoped, tag = 'input window, operand 1, single buffered']
    #allocation6 [shape = 's32[1]{0}', space=sflag, size = 0x4, scoped, tag = 'scoped memory for tpu_custom_call.1']
    #allocation7 [shape = 'u8[512]{0}', space=vmem, size = 0x400, scoped, tag = 'output window, operand 0, single buffered']
    %7 = vsyncpa [#allocation3], 0
    %8 = vsyncpa [#allocation6], 0
    %9 = vsyncpa [#allocation4], 0
    // Predicated region
    $region2: #{tpu_custom_call.1} parent=1 // pred_check
      _
    $region3: #{tpu_custom_call.1} parent=1 // pred_check_branch
      %11 = sbr.rel (0) target = $region5
    $region4: #{tpu_custom_call.1} parent=1 // pred_region
      %s13 = ssub.s32 128, 128
      %14 = vsyncadd [#allocation3], %s13
      %s16 = sshll.u32 [#allocation2], 4
      %s17 = int_to_ptr.vmem [resolvable:$true] %s16
      %19 = dma.hbm_to_vmem [thread:$0]  %s0, 128, %s17, [#allocation3]
    $region5: #{tpu_custom_call.1} parent=1 // pred_fallthru
      _
    // Predicated region
    $region6: #{tpu_custom_call.1} parent=1 // pred_check
      _
    $region7: #{tpu_custom_call.1} parent=1 // pred_check_branch
      %21 = sbr.rel (0) target = $region9
    $region8: #{tpu_custom_call.1} parent=1 // pred_region
      %s23 = ssub.s32 128, 128
      %24 = vsyncadd [#allocation6], %s23
      %s26 = sshll.u32 [#allocation5], 4
      %s27 = int_to_ptr.vmem [resolvable:$true] %s26
      %29 = dma.hbm_to_vmem [thread:$0]  %s1, 128, %s27, [#allocation6]
    $region9: #{tpu_custom_call.1} parent=1 // pred_fallthru
      _
    // Predicated region
    $region10: #{tpu_custom_call.1} parent=1 // pred_check
      _
    $region11: #{tpu_custom_call.1} parent=1 // pred_check_branch
      %31 = sbr.rel (0) target = $region13
    $region12: #{tpu_custom_call.1} parent=1 // pred_region
      %32 = dma.done [#allocation3], 128
    $region13: #{tpu_custom_call.1} parent=1 // pred_fallthru
      _
    // Predicated region
    $region14: #{tpu_custom_call.1} parent=1 // pred_check
      _
    $region15: #{tpu_custom_call.1} parent=1 // pred_check_branch
      %34 = sbr.rel (0) target = $region17
    $region16: #{tpu_custom_call.1} parent=1 // pred_region
      %35 = dma.done [#allocation6], 128
    $region17: #{tpu_custom_call.1} parent=1 // pred_fallthru
      _
    %v36 = vld [vmem:[#allocation2] sm:$0xff]
    %v37 = vld [vmem:[#allocation5] sm:$0xff]
    %v38 = vsub.f32 %v37, %v36
    %v39 = vmul.f32 %v38, %v38
    %vm40 = vcmask 261120
    %v41 = vsel %vm40, %v39, 0.0
    %42 = vadd.xlane.f32.xlu0 %v41
    %v43 = vpop.xlane.xlu0 %42
    %v45 = vlaneseq
    %v46 = vand.u32 %v45, 127
    %v47 = vlaneseq
    %v48 = vshrl.u32 %v47, 7
    %v49 = vsub.s32 %v46, %v48
    %v50 = vrot.slane %v43, %v49
    %vm52 = vcmask 57344
    %53 = vst.msk [vmem:[#allocation7] sm:$0x1] %vm52, %v50
    // Predicated region
    $region18: #{tpu_custom_call.1} parent=1 // pred_check
      _
    $region19: #{tpu_custom_call.1} parent=1 // pred_check_branch
      %55 = sbr.rel (0) target = $region21
    $region20: #{tpu_custom_call.1} parent=1 // pred_region
      %s57 = ssub.s32 16, 16
      %58 = vsyncadd [#allocation4], %s57
      %s60 = sshll.u32 [#allocation7], 4
      %s61 = int_to_ptr.vmem [resolvable:$true] %s60
      %63 = dma.vmem_to_hbm [thread:$0]  %s61, 16, %s2, [#allocation4]
    $region21: #{tpu_custom_call.1} parent=1 // pred_fallthru
      _
    // Predicated region
    $region22: #{tpu_custom_call.1} parent=1 // pred_check
      _
    $region23: #{tpu_custom_call.1} parent=1 // pred_check_branch
      %65 = sbr.rel (0) target = $region25
    $region24: #{tpu_custom_call.1} parent=1 // pred_region
      %66 = dma.done [#allocation4], 16
    $region25: #{tpu_custom_call.1} parent=1 // pred_fallthru
      _
    %67 = vsyncpa [#allocation3], 1
    %68 = vsyncpa [#allocation6], 1
    %69 = vsyncpa [#allocation4], 1

</llo_original>
